<compile_context>
chip_gen: v5e
topology: v5e:2x2
jax: 0.10.0
libtpu: 0.0.40
codegen_flags: <defaults>
</compile_context>

<pallas_src>
import jax
import jax.numpy as jnp
from jax.experimental import pallas as pl
from jax.experimental.pallas import tpu as pltpu


def _attn_agg_kernel(x_ref, wa_ref, rep_ref, m_ref, b_ref, out_ref):
    # x_ref:   (bn, W*D)  lane-dense walks (node-major rows)
    # wa_ref:  (W*D, W)   block-diag(a.weight @ linear.weight): logits selector
    # rep_ref: (W, W*D)   0/1 selector that broadcasts p back over D lanes
    # m_ref:   (W*D, D)   linear.weight.T tiled W times (group-sum + Linear fused)
    # b_ref:   (1, D)     linear.bias
    # out_ref: (bn, D)
    x = x_ref[...]                                             # native dtype

    # Attention logits per walk: one small MXU matmul, f32 accumulation.
    e = jnp.dot(x, wa_ref[...], preferred_element_type=jnp.float32)   # (bn, W)

    # Softmax over the walk axis, max-stabilized, in f32 (tiny: bn x W).
    e = e - jnp.max(e, axis=-1, keepdims=True)
    p = jnp.exp(e)
    p = p * pl.reciprocal(jnp.sum(p, axis=-1, keepdims=True), approx=False)

    # Broadcast p back over each walk's D lanes with a selector matmul; this
    # keeps everything lane-dense (an in-kernel reshape would relayout) and
    # keeps the big (bn, W*D) intermediates in the input dtype.
    p_full = jnp.dot(p.astype(x.dtype), rep_ref[...],
                     preferred_element_type=x.dtype)                  # (bn, W*D)

    # Weighted group-sum and the Linear layer fused into a single matmul:
    #   out = sum_w p_w * (x_w @ W^T) + b == ((p_full * x) @ tile(W^T, W)) + b
    out = jnp.dot(p_full * x, m_ref[...], preferred_element_type=jnp.float32)
    out = out + b_ref[...].astype(jnp.float32)
    out_ref[...] = out.astype(out_ref.dtype)


def _vmem_budget_bytes():
    """Usable per-call VMEM budget derived from the actual chip generation."""
    try:
        cap = int(getattr(pltpu.get_tpu_info(), "vmem_capacity_bytes", 0))
    except Exception:
        cap = 0
    if cap <= 0:
        cap = 64 << 20          # conservative fallback (v7x per-TC VMEM)
    # ~70% of physical: ~90 MiB on 128 MiB parts (v5e/v6e), ~45 MiB on v7x.
    return (cap * 7) // 10


def _choose_block_n(N, W, D, x_itemsize, p_itemsize, budget_bytes):
    """Largest node block that pipelines well and stays inside the budget."""
    lane = lambda n: ((n + 127) // 128) * 128
    row_in = lane(W * D) * x_itemsize          # one lane-dense walk row in VMEM
    row_out = lane(D) * x_itemsize
    # Double-buffered input + output blocks, plus ~2 block-sized working
    # values (p_full and p_full*x) in the input dtype.
    per_node = 2 * row_in + 2 * row_out + 2 * row_in
    # Constant-index parameter blocks (assume double buffering to be safe).
    params = 2 * (W * D * lane(W) * x_itemsize        # block-diag wa selector
                  + 8 * lane(W * D) * x_itemsize      # p-broadcast selector
                  + W * D * lane(D) * p_itemsize      # tiled weight.T
                  + 8 * lane(D) * p_itemsize)         # bias
    avail = max(per_node, budget_bytes - params)
    cap = max(1, avail // per_node)
    if N > 1:
        # At least 2 grid steps: enables DMA/compute pipelining and lets the
        # "parallel" axis feed both TensorCores on v7x.
        cap = min(cap, pl.cdiv(N, 2))
    bn = min(N, cap)
    if bn < N:
        # Partial-array blocks must be sublane (8) aligned.
        bn = min(N, max(8, (bn // 8) * 8))
    return int(max(1, bn))


def _run_block(x2, wa_mat, rep, m, b2, n_rows, block_n, W, D, vmem_limit):
    """pallas_call over the first n_rows rows of x2 (block_n divides n_rows)."""
    grid = (n_rows // block_n,)
    return pl.pallas_call(
        _attn_agg_kernel,
        out_shape=jax.ShapeDtypeStruct((n_rows, D), x2.dtype),
        grid_spec=pltpu.PrefetchScalarGridSpec(
            num_scalar_prefetch=0,
            grid=grid,
            in_specs=[
                pl.BlockSpec((block_n, W * D), lambda i: (i, 0)),
                pl.BlockSpec((W * D, W), lambda i: (0, 0)),
                pl.BlockSpec((W, W * D), lambda i: (0, 0)),
                pl.BlockSpec((W * D, D), lambda i: (0, 0)),
                pl.BlockSpec((1, D), lambda i: (0, 0)),
            ],
            out_specs=pl.BlockSpec((block_n, D), lambda i: (i, 0)),
        ),
        compiler_params=pltpu.CompilerParams(
            dimension_semantics=("parallel",),
            vmem_limit_bytes=int(vmem_limit)),
    )(x2, wa_mat, rep, m, b2)


def attention_aggregator2_forward(walks, weight, bias, a_weight, *, block_n=None):
    """walks: (N, W, D); weight: (D, D) torch Linear layout (out, in);
    bias: (D,); a_weight: (1, D) torch Linear(D, 1) layout."""
    N, W, D = walks.shape
    xdt = walks.dtype
    x2 = walks.reshape(N, W * D)            # contiguous: no data movement

    # Parameter prep (tiny, parameter-only, done once outside the kernel).
    wa = (a_weight.astype(jnp.float32) @ weight.astype(jnp.float32))       # (1, D)
    wa_mat = jnp.kron(jnp.eye(W, dtype=jnp.float32),
                      wa.reshape(D, 1)).astype(xdt)                        # (W*D, W)
    rep = jnp.kron(jnp.eye(W, dtype=xdt), jnp.ones((1, D), dtype=xdt))     # (W, W*D)
    m = jnp.tile(weight.T, (W, 1))                                         # (W*D, D)
    b2 = bias.reshape(1, D)

    budget = _vmem_budget_bytes()
    if block_n is None:
        block_n = _choose_block_n(N, W, D, jnp.dtype(xdt).itemsize,
                                  jnp.dtype(weight.dtype).itemsize, budget)
    block_n = max(1, min(int(block_n), N))
    if block_n < N and block_n % 8 != 0:
        block_n = min(N, max(8, (block_n // 8) * 8))

    # Ragged N: run the bulk over the full, untouched input (grid simply does
    # not visit the tail rows), then a second tiny call over the leftover
    # (< block_n) rows.  No full-input pad/copy ever happens.
    n_main = (N // block_n) * block_n
    rem = N - n_main

    out_main = _run_block(x2, wa_mat, rep, m, b2, n_main, block_n, W, D, budget)
    if rem == 0:
        return out_main

    x_tail = x2[n_main:]                    # only the ragged tail rows (< block_n)
    out_tail = _run_block(x_tail, wa_mat, rep, m, b2, rem, rem, W, D, budget)
    return jnp.concatenate([out_main, out_tail], axis=0)


def _reference(walks, weight, bias, a_weight):
    sp = jnp.einsum("nwd,ed->nwe", walks, weight) + bias
    e = jnp.einsum("nwd,od->nwo", sp, a_weight)
    p = jax.nn.softmax(e, axis=-2)
    return jnp.sum(sp * p, axis=-2)


if __name__ == "__main__":
    # Small shapes: n_nodes N=64, walks per node W=8, input_dimension D=32.
    N, W, D = 64, 8, 32
    key = jax.random.PRNGKey(0)
    k1, k2, k3, k4 = jax.random.split(key, 4)

    walks = jax.random.normal(k1, (N, W, D), dtype=jnp.float32)
    # torch Linear shapes: weight (out, in), bias (out,), a.weight (1, in)
    weight = jax.random.normal(k2, (D, D), dtype=jnp.float32) * 0.1
    bias = jax.random.normal(k3, (D,), dtype=jnp.float32) * 0.1
    a_weight = jax.random.normal(k4, (1, D), dtype=jnp.float32) * 0.1

    ref = _reference(walks, weight, bias, a_weight)

    # Auto block_n (multi-step grid, pipelined, N divisible -> single call).
    out = attention_aggregator2_forward(walks, weight, bias, a_weight)
    out = jax.block_until_ready(out)
    assert out.shape == (N, D)
    err = jnp.max(jnp.abs(out - ref))
    assert jnp.allclose(out, ref, atol=2e-3, rtol=2e-3), (
        f"mismatch vs reference (max abs err {err})")

    # Exercise the ragged path (block_n does not divide N: main + tail call).
    out2 = attention_aggregator2_forward(walks, weight, bias, a_weight, block_n=24)
    out2 = jax.block_until_ready(out2)
    assert out2.shape == (N, D)
    err2 = jnp.max(jnp.abs(out2 - ref))
    assert jnp.allclose(out2, ref, atol=2e-3, rtol=2e-3), (
        f"mismatch vs reference (max abs err {err2})")

    print("KERNEL_OK")
</pallas_src>

<mosaic_0001>
module attributes {stable_mosaic.version = 11 : i64} {
  func.func @_attn_agg_kernel(%arg0: i32, %arg1: memref<32x256xf32, #tpu.memory_space<vmem>>, %arg2: memref<256x8xf32, #tpu.memory_space<vmem>>, %arg3: memref<8x256xf32, #tpu.memory_space<vmem>>, %arg4: memref<256x32xf32, #tpu.memory_space<vmem>>, %arg5: memref<1x32xf32, #tpu.memory_space<vmem>>, %arg6: memref<32x32xf32, #tpu.memory_space<vmem>>) attributes {dimension_semantics = [#tpu.dimension_semantics<parallel>], iteration_bounds = array<i64: 2>, scalar_prefetch = 0 : i64, scratch_operands = 0 : i64, tpu.core_type = #tpu.core_type<tc>, window_params = [{transform_indices = @transform_0, window_bounds = array<i64: 32, 256>}, {pipeline_mode = #tpu.pipeline_mode<synchronous>, transform_indices = @transform_1, window_bounds = array<i64: 256, 8>}, {pipeline_mode = #tpu.pipeline_mode<synchronous>, transform_indices = @transform_2, window_bounds = array<i64: 8, 256>}, {pipeline_mode = #tpu.pipeline_mode<synchronous>, transform_indices = @transform_3, window_bounds = array<i64: 256, 32>}, {pipeline_mode = #tpu.pipeline_mode<synchronous>, transform_indices = @transform_4, window_bounds = array<i64: 1, 32>}, {transform_indices = @transform_5, window_bounds = array<i64: 32, 32>}]} {
    %c0 = arith.constant 0 : index
    %c0_0 = arith.constant 0 : index
    %0 = vector.load %arg1[%c0, %c0_0] : memref<32x256xf32, #tpu.memory_space<vmem>>, vector<32x256xf32>
    %c0_1 = arith.constant 0 : index
    %c0_2 = arith.constant 0 : index
    %1 = vector.load %arg2[%c0_1, %c0_2] : memref<256x8xf32, #tpu.memory_space<vmem>>, vector<256x8xf32>
    %cst = arith.constant dense<0.000000e+00> : vector<32x8xf32>
    %2 = tpu.matmul %0, %1, %cst {dimension_numbers = #tpu.dot_dimension_numbers<[1], [0], [0], [1], [0, 0, 1, 1], [], []>} : vector<32x256xf32>, vector<256x8xf32>, vector<32x8xf32> -> vector<32x8xf32>
    %cst_3 = arith.constant dense<0xFF800000> : vector<32xf32>
    %3 = vector.multi_reduction <maximumf>, %2, %cst_3 [1] : vector<32x8xf32> to vector<32xf32>
    %4 = vector.shape_cast %3 : vector<32xf32> to vector<32x1xf32>
    %5 = vector.broadcast %4 : vector<32x1xf32> to vector<32x8xf32>
    %6 = arith.subf %2, %5 : vector<32x8xf32>
    %7 = math.exp %6 : vector<32x8xf32>
    %cst_4 = arith.constant dense<0.000000e+00> : vector<32xf32>
    %8 = vector.multi_reduction <add>, %7, %cst_4 [1] : vector<32x8xf32> to vector<32xf32>
    %9 = vector.shape_cast %8 : vector<32xf32> to vector<32x1xf32>
    %10 = tpu.reciprocal %9 : vector<32x1xf32> -> vector<32x1xf32>
    %11 = vector.broadcast %10 : vector<32x1xf32> to vector<32x8xf32>
    %12 = arith.mulf %7, %11 : vector<32x8xf32>
    %c0_5 = arith.constant 0 : index
    %c0_6 = arith.constant 0 : index
    %13 = vector.load %arg3[%c0_5, %c0_6] : memref<8x256xf32, #tpu.memory_space<vmem>>, vector<8x256xf32>
    %cst_7 = arith.constant dense<0.000000e+00> : vector<32x256xf32>
    %14 = tpu.matmul %12, %13, %cst_7 {dimension_numbers = #tpu.dot_dimension_numbers<[1], [0], [0], [1], [0, 0, 1, 1], [], []>} : vector<32x8xf32>, vector<8x256xf32>, vector<32x256xf32> -> vector<32x256xf32>
    %15 = arith.mulf %14, %0 : vector<32x256xf32>
    %c0_8 = arith.constant 0 : index
    %c0_9 = arith.constant 0 : index
    %16 = vector.load %arg4[%c0_8, %c0_9] : memref<256x32xf32, #tpu.memory_space<vmem>>, vector<256x32xf32>
    %cst_10 = arith.constant dense<0.000000e+00> : vector<32x32xf32>
    %17 = tpu.matmul %15, %16, %cst_10 {dimension_numbers = #tpu.dot_dimension_numbers<[1], [0], [0], [1], [0, 0, 1, 1], [], []>} : vector<32x256xf32>, vector<256x32xf32>, vector<32x32xf32> -> vector<32x32xf32>
    %c0_11 = arith.constant 0 : index
    %c0_12 = arith.constant 0 : index
    %18 = vector.load %arg5[%c0_11, %c0_12] : memref<1x32xf32, #tpu.memory_space<vmem>>, vector<1x32xf32>
    %19 = vector.broadcast %18 : vector<1x32xf32> to vector<32x32xf32>
    %20 = arith.addf %17, %19 : vector<32x32xf32>
    %c0_13 = arith.constant 0 : index
    %c0_14 = arith.constant 0 : index
    %21 = vector.load %arg6[%c0_13, %c0_14] : memref<32x32xf32, #tpu.memory_space<vmem>>, vector<32x32xf32>
    tpu.vector_store %arg6[%c0_13, %c0_14], %20 {strides = array<i32>} : memref<32x32xf32, #tpu.memory_space<vmem>>, vector<32x32xf32>,
    return
  }
  func.func @transform_0(%arg0: i32) -> (i32, i32) {
    %c0_i32 = arith.constant 0 : i32
    %c0_i32_0 = arith.constant 0 : i32
    return %arg0, %c0_i32 : i32, i32
  }
  func.func @transform_1(%arg0: i32) -> (i32, i32) {
    %c0_i32 = arith.constant 0 : i32
    %c0_i32_0 = arith.constant 0 : i32
    %c0_i32_1 = arith.constant 0 : i32
    return %c0_i32, %c0_i32_0 : i32, i32
  }
  func.func @transform_2(%arg0: i32) -> (i32, i32) {
    %c0_i32 = arith.constant 0 : i32
    %c0_i32_0 = arith.constant 0 : i32
    %c0_i32_1 = arith.constant 0 : i32
    return %c0_i32, %c0_i32_0 : i32, i32
  }
  func.func @transform_3(%arg0: i32) -> (i32, i32) {
    %c0_i32 = arith.constant 0 : i32
    %c0_i32_0 = arith.constant 0 : i32
    %c0_i32_1 = arith.constant 0 : i32
    return %c0_i32, %c0_i32_0 : i32, i32
  }
  func.func @transform_4(%arg0: i32) -> (i32, i32) {
    %c0_i32 = arith.constant 0 : i32
    %c0_i32_0 = arith.constant 0 : i32
    %c0_i32_1 = arith.constant 0 : i32
    return %c0_i32, %c0_i32_0 : i32, i32
  }
  func.func @transform_5(%arg0: i32) -> (i32, i32) {
    %c0_i32 = arith.constant 0 : i32
    %c0_i32_0 = arith.constant 0 : i32
    return %arg0, %c0_i32 : i32, i32
  }
}

</mosaic_0001>

<llo_original>
// kernel: tpu_custom_call.1
$region0: #{tpu_custom_call.1}
  #allocation0 [shape = 'u32[]', space=smem, size = 0x4, offset = 0x4, fixed_abs, tag = 'smem constant byte address 0x4 - core index']
  #allocation1 [shape = 'u32[72,128]{1,0:T(1,128)}', space=vmem, size = 0x9000, scoped, tag = 'internal scratch']
  %s0 = inlined_call_operand.vmem [shape: f32[64,256], index: 0, kind: input, shape index: {}]
  %s1 = inlined_call_operand.vmem [shape: f32[256,8], index: 1, kind: input, shape index: {}]
  %s2 = inlined_call_operand.vmem [shape: f32[8,256], index: 2, kind: input, shape index: {}]
  %s3 = inlined_call_operand.vmem [shape: f32[256,32], index: 3, kind: input, shape index: {}]
  %s4 = inlined_call_operand.vmem [shape: f32[1,32], index: 4, kind: input, shape index: {}]
  %s5 = inlined_call_operand.vmem [shape: f32[64,32], index: 5, kind: output, shape index: {}]
  %s6 = sld [smem:[#allocation0]]
  $region53: #{tpu_custom_call.1} parent=0
    _
  %s8 = ssub.s32 1, %s6
  %s9 = scalar_select 0, %s8, %s6
  loop: start=0, step=1, limit=4
  $region2: #{tpu_custom_call.1} parent=0 // loop_pre_header
    _
  $region3: #{tpu_custom_call.1} parent=0 // loop_header
    %s11 = sphi 0, %s15
    %p12 = scmp.ge.s32.totalorder %s11, 4
    %s21 = sphi 0, %s23
    %s24 = sphi 0, %s21
    %s25 = sphi 0, %s24
    %s41 = sphi 0, %s25
    %s45 = sphi 0, %s45
    %s47 = sphi 0, %s45
    %s48 = sphi 0, %s47
    %s62 = sphi 0, %s48
    %s66 = sphi 0, %s66
    %s68 = sphi 0, %s66
    %s69 = sphi 0, %s68
    %s83 = sphi 0, %s69
    %s87 = sphi 0, %s87
    %s89 = sphi 0, %s87
    %s90 = sphi 0, %s89
    %s104 = sphi 0, %s90
    %s108 = sphi 0, %s108
    %s110 = sphi 0, %s108
    %s111 = sphi 0, %s110
    %s125 = sphi 0, %s111
    %s131 = sphi 0, %s133
    %s134 = sphi 0, %s131
    %s135 = sphi 0, %s134
    %s151 = sphi 0, %s135
  $region4: #{tpu_custom_call.1} parent=0 // loop_header_branch
    %14 = sbr.rel (%p12) target = $region8
  $region5: #{tpu_custom_call.1} parent=0 // loop_body
    %s16 = ssub.s32 %s11, 1
    %s17 = ssub.s32 %s11, 2
    %s18 = sadd.s32 %s11, 1
    %s19 = ssub.s32 %s11, %s18
    %p20 = scmp.eq.s32.totalorder %s19, 0
    %s22 = sadd.s32 %s21, 1
    %s23 = scalar_select %p20, %s21, %s22
    %p26 = pneg %p20
    %p27 = scmp.eq.s32.totalorder %s11, 1
    %p28 = por %p26, %p27
    %p29 = scmp.ne.s32.totalorder %s21, %s24
    %p30 = scmp.eq.s32.totalorder %s11, 0
    %p31 = por %p29, %p30
    %p32 = scmp.ne.s32.totalorder %s21, %s24
    %p33 = scmp.eq.s32.totalorder %s16, 1
    %p34 = por %p32, %p33
    %p35 = scmp.ne.s32.totalorder %s24, %s25
    %p36 = scmp.eq.s32.totalorder %s16, 0
    %p37 = por %p35, %p36
    %p38 = scmp.ne.s32.totalorder %s24, %s25
    %p39 = scmp.eq.s32.totalorder %s17, 1
    %p40 = por %p38, %p39
    %p42 = scmp.ne.s32.totalorder %s25, %s41
    %p43 = scmp.eq.s32.totalorder %s17, 0
    %p44 = por %p42, %p43
    %s46 = sadd.s32 %s45, 1
    %p49 = scmp.eq.s32.totalorder %s11, 1
    %p50 = scmp.ne.s32.totalorder %s45, %s47
    %p51 = scmp.eq.s32.totalorder %s11, 0
    %p52 = por %p50, %p51
    %p53 = scmp.ne.s32.totalorder %s45, %s47
    %p54 = scmp.eq.s32.totalorder %s16, 1
    %p55 = por %p53, %p54
    %p56 = scmp.ne.s32.totalorder %s47, %s48
    %p57 = scmp.eq.s32.totalorder %s16, 0
    %p58 = por %p56, %p57
    %p59 = scmp.ne.s32.totalorder %s47, %s48
    %p60 = scmp.eq.s32.totalorder %s17, 1
    %p61 = por %p59, %p60
    %p63 = scmp.ne.s32.totalorder %s48, %s62
    %p64 = scmp.eq.s32.totalorder %s17, 0
    %p65 = por %p63, %p64
    %s67 = sadd.s32 %s66, 1
    %p70 = scmp.eq.s32.totalorder %s11, 1
    %p71 = scmp.ne.s32.totalorder %s66, %s68
    %p72 = scmp.eq.s32.totalorder %s11, 0
    %p73 = por %p71, %p72
    %p74 = scmp.ne.s32.totalorder %s66, %s68
    %p75 = scmp.eq.s32.totalorder %s16, 1
    %p76 = por %p74, %p75
    %p77 = scmp.ne.s32.totalorder %s68, %s69
    %p78 = scmp.eq.s32.totalorder %s16, 0
    %p79 = por %p77, %p78
    %p80 = scmp.ne.s32.totalorder %s68, %s69
    %p81 = scmp.eq.s32.totalorder %s17, 1
    %p82 = por %p80, %p81
    %p84 = scmp.ne.s32.totalorder %s69, %s83
    %p85 = scmp.eq.s32.totalorder %s17, 0
    %p86 = por %p84, %p85
    %s88 = sadd.s32 %s87, 1
    %p91 = scmp.eq.s32.totalorder %s11, 1
    %p92 = scmp.ne.s32.totalorder %s87, %s89
    %p93 = scmp.eq.s32.totalorder %s11, 0
    %p94 = por %p92, %p93
    %p95 = scmp.ne.s32.totalorder %s87, %s89
    %p96 = scmp.eq.s32.totalorder %s16, 1
    %p97 = por %p95, %p96
    %p98 = scmp.ne.s32.totalorder %s89, %s90
    %p99 = scmp.eq.s32.totalorder %s16, 0
    %p100 = por %p98, %p99
    %p101 = scmp.ne.s32.totalorder %s89, %s90
    %p102 = scmp.eq.s32.totalorder %s17, 1
    %p103 = por %p101, %p102
    %p105 = scmp.ne.s32.totalorder %s90, %s104
    %p106 = scmp.eq.s32.totalorder %s17, 0
    %p107 = por %p105, %p106
    %s109 = sadd.s32 %s108, 1
    %p112 = scmp.eq.s32.totalorder %s11, 1
    %p113 = scmp.ne.s32.totalorder %s108, %s110
    %p114 = scmp.eq.s32.totalorder %s11, 0
    %p115 = por %p113, %p114
    %p116 = scmp.ne.s32.totalorder %s108, %s110
    %p117 = scmp.eq.s32.totalorder %s16, 1
    %p118 = por %p116, %p117
    %p119 = scmp.ne.s32.totalorder %s110, %s111
    %p120 = scmp.eq.s32.totalorder %s16, 0
    %p121 = por %p119, %p120
    %p122 = scmp.ne.s32.totalorder %s110, %s111
    %p123 = scmp.eq.s32.totalorder %s17, 1
    %p124 = por %p122, %p123
    %p126 = scmp.ne.s32.totalorder %s111, %s125
    %p127 = scmp.eq.s32.totalorder %s17, 0
    %p128 = por %p126, %p127
    %s129 = ssub.s32 %s11, %s18
    %p130 = scmp.eq.s32.totalorder %s129, 0
    %s132 = sadd.s32 %s131, 1
    %s133 = scalar_select %p130, %s131, %s132
    %p136 = pneg %p130
    %p137 = scmp.eq.s32.totalorder %s11, 1
    %p138 = por %p136, %p137
    %p139 = scmp.ne.s32.totalorder %s131, %s134
    %p140 = scmp.eq.s32.totalorder %s11, 0
    %p141 = por %p139, %p140
    %p142 = scmp.ne.s32.totalorder %s131, %s134
    %p143 = scmp.eq.s32.totalorder %s16, 1
    %p144 = por %p142, %p143
    %p145 = scmp.ne.s32.totalorder %s134, %s135
    %p146 = scmp.eq.s32.totalorder %s16, 0
    %p147 = por %p145, %p146
    %p148 = scmp.ne.s32.totalorder %s134, %s135
    %p149 = scmp.eq.s32.totalorder %s17, 1
    %p150 = por %p148, %p149
    %p152 = scmp.ne.s32.totalorder %s135, %s151
    %p153 = scmp.eq.s32.totalorder %s17, 0
    %p154 = por %p152, %p153
    %p155 = scmp.le.s32.totalorder 1, %s11
    %p156 = scmp.lt.s32.totalorder %s11, 3
    %p157 = pnand %p155, %p156
    %p158 = pneg %p157
    // Predicated region
    $region9: #{tpu_custom_call.1} parent=5 // pred_check
      _
    $region10: #{tpu_custom_call.1} parent=5 // pred_check_branch
      %160 = sbr.rel (%p157) target = $region12
    $region11: #{tpu_custom_call.1} parent=5 // pred_region
      %s161 = ssub.s32 %s11, 1
      // Predicated region
      $region13: #{tpu_custom_call.1} parent=11 // pred_check
        %p162 = pneg %p58
      $region14: #{tpu_custom_call.1} parent=11 // pred_check_branch
        %164 = sbr.rel (%p162) target = $region16
      $region15: #{tpu_custom_call.1} parent=11 // pred_region
        _
      $region16: #{tpu_custom_call.1} parent=11 // pred_fallthru
        _
      // Predicated region
      $region17: #{tpu_custom_call.1} parent=11 // pred_check
        %p165 = pneg %p79
      $region18: #{tpu_custom_call.1} parent=11 // pred_check_branch
        %167 = sbr.rel (%p165) target = $region20
      $region19: #{tpu_custom_call.1} parent=11 // pred_region
        _
      $region20: #{tpu_custom_call.1} parent=11 // pred_fallthru
        _
      // Predicated region
      $region21: #{tpu_custom_call.1} parent=11 // pred_check
        %p168 = pneg %p100
      $region22: #{tpu_custom_call.1} parent=11 // pred_check_branch
        %170 = sbr.rel (%p168) target = $region24
      $region23: #{tpu_custom_call.1} parent=11 // pred_region
        _
      $region24: #{tpu_custom_call.1} parent=11 // pred_fallthru
        _
      // Predicated region
      $region25: #{tpu_custom_call.1} parent=11 // pred_check
        %p171 = pneg %p121
      $region26: #{tpu_custom_call.1} parent=11 // pred_check_branch
        %173 = sbr.rel (%p171) target = $region28
      $region27: #{tpu_custom_call.1} parent=11 // pred_region
        _
      $region28: #{tpu_custom_call.1} parent=11 // pred_fallthru
        _
    $region12: #{tpu_custom_call.1} parent=5 // pred_fallthru
      _
    %p174 = scmp.lt.s32.totalorder %s11, 2
    // Predicated region
    $region29: #{tpu_custom_call.1} parent=5 // pred_check
      %p175 = pneg %p174
    $region30: #{tpu_custom_call.1} parent=5 // pred_check_branch
      %177 = sbr.rel (%p175) target = $region32
    $region31: #{tpu_custom_call.1} parent=5 // pred_region
      // Predicated region
      $region33: #{tpu_custom_call.1} parent=31 // pred_check
        %p178 = pneg %p31
      $region34: #{tpu_custom_call.1} parent=31 // pred_check_branch
        %180 = sbr.rel (%p178) target = $region36
      $region35: #{tpu_custom_call.1} parent=31 // pred_region
        %s181 = smul.u32 4, %s11
        %p182 = scmp.lt.s32.totalorder %s181, 7
        %s183 = scalar_select %p182, %s181, 7
        %s184 = smul.addr %s183, 2
        %s185 = smul.addr %s184, 8
        %s186 = scalar_lea.vmem %s0, %s185
        %s187 = smul.u32 4, %s11
      $region36: #{tpu_custom_call.1} parent=31 // pred_fallthru
        _
    $region32: #{tpu_custom_call.1} parent=5 // pred_fallthru
      _
    %p188 = scmp.le.s32.totalorder 1, %s11
    %p189 = scmp.lt.s32.totalorder %s11, 3
    %p190 = pnand %p188, %p189
    %p191 = pneg %p190
    // Predicated region
    $region37: #{tpu_custom_call.1} parent=5 // pred_check
      _
    $region38: #{tpu_custom_call.1} parent=5 // pred_check_branch
      %193 = sbr.rel (%p190) target = $region40
    $region39: #{tpu_custom_call.1} parent=5 // pred_region
      %s194 = ssub.s32 %s11, 1
      %s195 = smul.u32 4, %s16
      %p196 = scmp.lt.s32.totalorder %s195, 7
      %s197 = scalar_select %p196, %s195, 7
      %s198 = smul.addr %s197, 2
      %s199 = smul.addr %s198, 8
      %s200 = scalar_lea.vmem %s0, %s199
      %p201 = pneg %p37
      %p202 = pneg %p34
      %p203 = pneg %p58
      %p204 = pneg %p55
      %p205 = pneg %p79
      %p206 = pneg %p76
      %p207 = pneg %p100
      %p208 = pneg %p97
      %p209 = pneg %p121
      %p210 = pneg %p118
      %p211 = pneg %p147
      %p212 = pneg %p144
      %s213 = smul.u32 4, %s16
      %p214 = scmp.lt.s32.totalorder %s213, 7
      %s215 = scalar_select %p214, %s213, 7
      %s216 = smul.addr %s215, 8
      %s217 = scalar_lea.vmem %s5, %s216
      %s218 = smul.u32 4, %s16
      %p219 = scmp.lt.s32.totalorder %s218, 7
      %s220 = scalar_select %p219, %s218, 7
      %s221 = smul.addr %s220, 2
      %s222 = smul.addr %s221, 8
      %s223 = scalar_lea.vmem %s0, %s222
      %s224 = smul.u32 4, %s16
      %s225 = smul.u32 4, %s16
      %p226 = scmp.lt.s32.totalorder %s225, 7
      %s227 = scalar_select %p226, %s225, 7
      %s228 = smul.addr %s227, 8
      %s229 = scalar_lea.vmem %s5, %s228
      %s230 = smul.u32 4, %s16
      %v231 = vld [vmem:[%s223] sm:$0xff]
      %v232 = vld [vmem:[%s223 + $0x8] sm:$0xff]
      %v233 = vld [vmem:[%s223 + $0x10] sm:$0xff]
      %v234 = vld [vmem:[%s223 + $0x18] sm:$0xff]
      %v235 = vld [vmem:[%s223 + $0x20] sm:$0xff]
      %v236 = vld [vmem:[%s223 + $0x28] sm:$0xff]
      %v237 = vld [vmem:[%s223 + $0x30] sm:$0xff]
      %v238 = vld [vmem:[%s223 + $0x38] sm:$0xff]
      %v239 = vld [vmem:[%s1] sm:$0xff]
      %v240 = vld [vmem:[%s1 + $0x8] sm:$0xff]
      %v241 = vld [vmem:[%s1 + $0x10] sm:$0xff]
      %v242 = vld [vmem:[%s1 + $0x18] sm:$0xff]
      %v243 = vld [vmem:[%s1 + $0x20] sm:$0xff]
      %v244 = vld [vmem:[%s1 + $0x28] sm:$0xff]
      %v245 = vld [vmem:[%s1 + $0x30] sm:$0xff]
      %v246 = vld [vmem:[%s1 + $0x38] sm:$0xff]
      %v247 = vld [vmem:[%s1 + $0x40] sm:$0xff]
      %v248 = vld [vmem:[%s1 + $0x48] sm:$0xff]
      %v249 = vld [vmem:[%s1 + $0x50] sm:$0xff]
      %v250 = vld [vmem:[%s1 + $0x58] sm:$0xff]
      %v251 = vld [vmem:[%s1 + $0x60] sm:$0xff]
      %v252 = vld [vmem:[%s1 + $0x68] sm:$0xff]
      %v253 = vld [vmem:[%s1 + $0x70] sm:$0xff]
      %v254 = vld [vmem:[%s1 + $0x78] sm:$0xff]
      %v255 = vld [vmem:[%s1 + $0x80] sm:$0xff]
      %v256 = vld [vmem:[%s1 + $0x88] sm:$0xff]
      %v257 = vld [vmem:[%s1 + $0x90] sm:$0xff]
      %v258 = vld [vmem:[%s1 + $0x98] sm:$0xff]
      %v259 = vld [vmem:[%s1 + $0xa0] sm:$0xff]
      %v260 = vld [vmem:[%s1 + $0xa8] sm:$0xff]
      %v261 = vld [vmem:[%s1 + $0xb0] sm:$0xff]
      %v262 = vld [vmem:[%s1 + $0xb8] sm:$0xff]
      %v263 = vld [vmem:[%s1 + $0xc0] sm:$0xff]
      %v264 = vld [vmem:[%s1 + $0xc8] sm:$0xff]
      %v265 = vld [vmem:[%s1 + $0xd0] sm:$0xff]
      %v266 = vld [vmem:[%s1 + $0xd8] sm:$0xff]
      %v267 = vld [vmem:[%s1 + $0xe0] sm:$0xff]
      %v268 = vld [vmem:[%s1 + $0xe8] sm:$0xff]
      %v269 = vld [vmem:[%s1 + $0xf0] sm:$0xff]
      %v270 = vld [vmem:[%s1 + $0xf8] sm:$0xff]
      %271 = vmatpush.msra.mxu0 %v254
      %272 = vmatpush.msra.mxu0 %v253
      %273 = vmatpush.msra.mxu0 %v252
      %274 = vmatpush.msra.mxu0 %v251
      %275 = vmatpush.msra.mxu0 %v250
      %276 = vmatpush.msra.mxu0 %v249
      %277 = vmatpush.msra.mxu0 %v248
      %278 = vmatpush.msra.mxu0 %v247
      %279 = vmatpush.msra.mxu0 %v246
      %280 = vmatpush.msra.mxu0 %v245
      %281 = vmatpush.msra.mxu0 %v244
      %282 = vmatpush.msra.mxu0 %v243
      %283 = vmatpush.msra.mxu0 %v242
      %284 = vmatpush.msra.mxu0 %v241
      %285 = vmatpush.msra.mxu0 %v240
      %286 = vmatpush.msra.mxu0 %v239
      %287 = vmatmul.f32.gmra.mxu0 %v231
      %v288 = vpop.f32.mrf.mxu0
      %v289 = vadd.f32 0.0, %v288
      %290 = vmatmul.f32.gmra.mxu0 %v233
      %v291 = vpop.f32.mrf.mxu0
      %v292 = vadd.f32 0.0, %v291
      %293 = vmatmul.f32.gmra.mxu0 %v235
      %v294 = vpop.f32.mrf.mxu0
      %v295 = vadd.f32 0.0, %v294
      %296 = vmatmul.f32.gmra.mxu0 %v237
      %v297 = vpop.f32.mrf.mxu0
      %v298 = vadd.f32 0.0, %v297
      %299 = vdwg.mxu0
      %300 = vmatpush.msra.mxu0 %v270
      %301 = vmatpush.msra.mxu0 %v269
      %302 = vmatpush.msra.mxu0 %v268
      %303 = vmatpush.msra.mxu0 %v267
      %304 = vmatpush.msra.mxu0 %v266
      %305 = vmatpush.msra.mxu0 %v265
      %306 = vmatpush.msra.mxu0 %v264
      %307 = vmatpush.msra.mxu0 %v263
      %308 = vmatpush.msra.mxu0 %v262
      %309 = vmatpush.msra.mxu0 %v261
      %310 = vmatpush.msra.mxu0 %v260
      %311 = vmatpush.msra.mxu0 %v259
      %312 = vmatpush.msra.mxu0 %v258
      %313 = vmatpush.msra.mxu0 %v257
      %314 = vmatpush.msra.mxu0 %v256
      %315 = vmatpush.msra.mxu0 %v255
      %316 = vmatmul.f32.gmra.mxu0 %v232
      %v317 = vpop.f32.mrf.mxu0
      %v318 = vadd.f32 %v289, %v317
      %319 = vmatmul.f32.gmra.mxu0 %v234
      %v320 = vpop.f32.mrf.mxu0
      %v321 = vadd.f32 %v292, %v320
      %322 = vmatmul.f32.gmra.mxu0 %v236
      %v323 = vpop.f32.mrf.mxu0
      %v324 = vadd.f32 %v295, %v323
      %325 = vmatmul.f32.gmra.mxu0 %v238
      %v326 = vpop.f32.mrf.mxu0
      %v327 = vadd.f32 %v298, %v326
      %328 = vdwg.mxu0
      %vm329 = vcmask 64512
      %v330 = vsel %vm329, %v318, -inf
      %331 = vmax.xlane.f32.xlu0 %v330
      %v332 = vpop.xlane.xlu0 %331
      %v333 = vsel %vm329, %v321, -inf
      %334 = vmax.xlane.f32.xlu0 %v333
      %v335 = vpop.xlane.xlu0 %334
      %v336 = vsel %vm329, %v324, -inf
      %337 = vmax.xlane.f32.xlu0 %v336
      %v338 = vpop.xlane.xlu0 %337
      %v339 = vsel %vm329, %v327, -inf
      %340 = vmax.xlane.f32.xlu0 %v339
      %v341 = vpop.xlane.xlu0 %340
      %v342 = vsub.f32 %v318, %v332
      %v343 = vsub.f32 %v321, %v335
      %v344 = vsub.f32 %v324, %v338
      %v345 = vsub.f32 %v327, %v341
      %v346 = vmul.f32 %v342, 1.442695
      %v347 = vpow.pop %v346
      %v348 = vmul.f32 %v343, 1.442695
      %v349 = vpow.pop %v348
      %v350 = vmul.f32 %v344, 1.442695
      %v351 = vpow.pop %v350
      %v352 = vmul.f32 %v345, 1.442695
      %v353 = vpow.pop %v352
      %v354 = vsel %vm329, %v347, 0.0
      %355 = vadd.xlane.f32.xlu0 %v354
      %v356 = vpop.xlane.xlu0 %355
      %v357 = vsel %vm329, %v349, 0.0
      %358 = vadd.xlane.f32.xlu0 %v357
      %v359 = vpop.xlane.xlu0 %358
      %v360 = vsel %vm329, %v351, 0.0
      %361 = vadd.xlane.f32.xlu0 %v360
      %v362 = vpop.xlane.xlu0 %361
      %v363 = vsel %vm329, %v353, 0.0
      %364 = vadd.xlane.f32.xlu0 %v363
      %v365 = vpop.xlane.xlu0 %364
      %v366 = vrcp.pop %v356
      %v367 = vmul.f32 %v356, %v366
      %v368 = vsub.f32 1.0, %v367
      %v369 = vmul.f32 %v366, %v368
      %v370 = vadd.f32 %v366, %v369
      %vm371 = vweird.f32 %v356
      %vm372 = vweird.f32 %v366
      %vm373 = vmor %vm371, %vm372
      %v374 = vsel %vm373, %v366, %v370
      %v375 = vand.u32 2147483647, %v356
      %vm376 = vcmp.eq.f32.partialorder %v375, 8.507059e+37
      %v377 = vand.u32 %v356, 2147483648
      %v378 = vor.u32 1.1754944e-38, %v377
      %v379 = vsel %vm376, %v378, %v374
      %v380 = vrcp.pop %v359
      %v381 = vmul.f32 %v359, %v380
      %v382 = vsub.f32 1.0, %v381
      %v383 = vmul.f32 %v380, %v382
      %v384 = vadd.f32 %v380, %v383
      %vm385 = vweird.f32 %v359
      %vm386 = vweird.f32 %v380
      %vm387 = vmor %vm385, %vm386
      %v388 = vsel %vm387, %v380, %v384
      %v389 = vand.u32 2147483647, %v359
      %vm390 = vcmp.eq.f32.partialorder %v389, 8.507059e+37
      %v391 = vand.u32 %v359, 2147483648
      %v392 = vor.u32 1.1754944e-38, %v391
      %v393 = vsel %vm390, %v392, %v388
      %v394 = vrcp.pop %v362
      %v395 = vmul.f32 %v362, %v394
      %v396 = vsub.f32 1.0, %v395
      %v397 = vmul.f32 %v394, %v396
      %v398 = vadd.f32 %v394, %v397
      %vm399 = vweird.f32 %v362
      %vm400 = vweird.f32 %v394
      %vm401 = vmor %vm399, %vm400
      %v402 = vsel %vm401, %v394, %v398
      %v403 = vand.u32 2147483647, %v362
      %vm404 = vcmp.eq.f32.partialorder %v403, 8.507059e+37
      %v405 = vand.u32 %v362, 2147483648
      %v406 = vor.u32 1.1754944e-38, %v405
      %v407 = vsel %vm404, %v406, %v402
      %v408 = vrcp.pop %v365
      %v409 = vmul.f32 %v365, %v408
      %v410 = vsub.f32 1.0, %v409
      %v411 = vmul.f32 %v408, %v410
      %v412 = vadd.f32 %v408, %v411
      %vm413 = vweird.f32 %v365
      %vm414 = vweird.f32 %v408
      %vm415 = vmor %vm413, %vm414
      %v416 = vsel %vm415, %v408, %v412
      %v417 = vand.u32 2147483647, %v365
      %vm418 = vcmp.eq.f32.partialorder %v417, 8.507059e+37
      %v419 = vand.u32 %v365, 2147483648
      %v420 = vor.u32 1.1754944e-38, %v419
      %v421 = vsel %vm418, %v420, %v416
      %v422 = vmul.f32 %v347, %v379
      %v423 = vmul.f32 %v349, %v393
      %v424 = vmul.f32 %v351, %v407
      %v425 = vmul.f32 %v353, %v421
      %v426 = vld [vmem:[%s2] sm:$0xff]
      %v427 = vld [vmem:[%s2 + $0x8] sm:$0xff]
      %v429 = vsel %vm329, %v422, 0
      %v432 = vsel %vm329, %v423, 0
      %v435 = vsel %vm329, %v424, 0
      %v438 = vsel %vm329, %v425, 0
      %440 = vmatpush.msra.mxu0 0.0
      %441 = vmatpush.msra.mxu0 0.0
      %442 = vmatpush.msra.mxu0 0.0
      %443 = vmatpush.msra.mxu0 0.0
      %444 = vmatpush.msra.mxu0 0.0
      %445 = vmatpush.msra.mxu0 0.0
      %446 = vmatpush.msra.mxu0 0.0
      %447 = vmatpush.msra.mxu0 0.0
      %448 = vmatpush.msra.mxu0 0.0
      %449 = vmatpush.msra.mxu0 0.0
      %450 = vmatpush.msra.mxu0 0.0
      %451 = vmatpush.msra.mxu0 0.0
      %452 = vmatpush.msra.mxu0 0.0
      %453 = vmatpush.msra.mxu0 0.0
      %454 = vmatpush.msra.mxu0 0.0
      %455 = vmatpush.msra.mxu0 %v426
      %456 = vmatmul.f32.gmra.mxu0 %v429
      %v457 = vpop.f32.mrf.mxu0
      %v458 = vadd.f32 0.0, %v457
      %459 = vmatmul.f32.gmra.mxu0 %v432
      %v460 = vpop.f32.mrf.mxu0
      %v461 = vadd.f32 0.0, %v460
      %462 = vmatmul.f32.gmra.mxu0 %v435
      %v463 = vpop.f32.mrf.mxu0
      %v464 = vadd.f32 0.0, %v463
      %465 = vmatmul.f32.gmra.mxu0 %v438
      %v466 = vpop.f32.mrf.mxu0
      %v467 = vadd.f32 0.0, %v466
      %468 = vdwg.mxu0
      %469 = vmatpush.msra.mxu0 0.0
      %470 = vmatpush.msra.mxu0 0.0
      %471 = vmatpush.msra.mxu0 0.0
      %472 = vmatpush.msra.mxu0 0.0
      %473 = vmatpush.msra.mxu0 0.0
      %474 = vmatpush.msra.mxu0 0.0
      %475 = vmatpush.msra.mxu0 0.0
      %476 = vmatpush.msra.mxu0 0.0
      %477 = vmatpush.msra.mxu0 0.0
      %478 = vmatpush.msra.mxu0 0.0
      %479 = vmatpush.msra.mxu0 0.0
      %480 = vmatpush.msra.mxu0 0.0
      %481 = vmatpush.msra.mxu0 0.0
      %482 = vmatpush.msra.mxu0 0.0
      %483 = vmatpush.msra.mxu0 0.0
      %484 = vmatpush.msra.mxu0 %v427
      %485 = vmatmul.f32.gmra.mxu0 %v429
      %v486 = vpop.f32.mrf.mxu0
      %v487 = vadd.f32 0.0, %v486
      %488 = vmatmul.f32.gmra.mxu0 %v432
      %v489 = vpop.f32.mrf.mxu0
      %v490 = vadd.f32 0.0, %v489
      %491 = vmatmul.f32.gmra.mxu0 %v435
      %v492 = vpop.f32.mrf.mxu0
      %v493 = vadd.f32 0.0, %v492
      %494 = vmatmul.f32.gmra.mxu0 %v438
      %v495 = vpop.f32.mrf.mxu0
      %v496 = vadd.f32 0.0, %v495
      %497 = vdwg.mxu0
      %v498 = vmul.f32 %v458, %v231
      %v499 = vmul.f32 %v487, %v232
      %v500 = vmul.f32 %v461, %v233
      %v501 = vmul.f32 %v490, %v234
      %v502 = vmul.f32 %v464, %v235
      %v503 = vmul.f32 %v493, %v236
      %v504 = vmul.f32 %v467, %v237
      %v505 = vmul.f32 %v496, %v238
      %v506 = vld [vmem:[%s3] sm:$0xff]
      %v507 = vld [vmem:[%s3 + $0x8] sm:$0xff]
      %v508 = vld [vmem:[%s3 + $0x10] sm:$0xff]
      %v509 = vld [vmem:[%s3 + $0x18] sm:$0xff]
      %v510 = vld [vmem:[%s3 + $0x20] sm:$0xff]
      %v511 = vld [vmem:[%s3 + $0x28] sm:$0xff]
      %v512 = vld [vmem:[%s3 + $0x30] sm:$0xff]
      %v513 = vld [vmem:[%s3 + $0x38] sm:$0xff]
      %v514 = vld [vmem:[%s3 + $0x40] sm:$0xff]
      %v515 = vld [vmem:[%s3 + $0x48] sm:$0xff]
      %v516 = vld [vmem:[%s3 + $0x50] sm:$0xff]
      %v517 = vld [vmem:[%s3 + $0x58] sm:$0xff]
      %v518 = vld [vmem:[%s3 + $0x60] sm:$0xff]
      %v519 = vld [vmem:[%s3 + $0x68] sm:$0xff]
      %v520 = vld [vmem:[%s3 + $0x70] sm:$0xff]
      %v521 = vld [vmem:[%s3 + $0x78] sm:$0xff]
      %v522 = vld [vmem:[%s3 + $0x80] sm:$0xff]
      %v523 = vld [vmem:[%s3 + $0x88] sm:$0xff]
      %v524 = vld [vmem:[%s3 + $0x90] sm:$0xff]
      %v525 = vld [vmem:[%s3 + $0x98] sm:$0xff]
      %v526 = vld [vmem:[%s3 + $0xa0] sm:$0xff]
      %v527 = vld [vmem:[%s3 + $0xa8] sm:$0xff]
      %v528 = vld [vmem:[%s3 + $0xb0] sm:$0xff]
      %v529 = vld [vmem:[%s3 + $0xb8] sm:$0xff]
      %v530 = vld [vmem:[%s3 + $0xc0] sm:$0xff]
      %v531 = vld [vmem:[%s3 + $0xc8] sm:$0xff]
      %v532 = vld [vmem:[%s3 + $0xd0] sm:$0xff]
      %v533 = vld [vmem:[%s3 + $0xd8] sm:$0xff]
      %v534 = vld [vmem:[%s3 + $0xe0] sm:$0xff]
      %v535 = vld [vmem:[%s3 + $0xe8] sm:$0xff]
      %v536 = vld [vmem:[%s3 + $0xf0] sm:$0xff]
      %v537 = vld [vmem:[%s3 + $0xf8] sm:$0xff]
      %v538 = vld [vmem:[%s4] sm:$0x1]
      %v540 = vperm.slane %v538, 0
      %542 = vmatpush.msra.mxu0 %v521
      %543 = vmatpush.msra.mxu0 %v520
      %544 = vmatpush.msra.mxu0 %v519
      %545 = vmatpush.msra.mxu0 %v518
      %546 = vmatpush.msra.mxu0 %v517
      %547 = vmatpush.msra.mxu0 %v516
      %548 = vmatpush.msra.mxu0 %v515
      %549 = vmatpush.msra.mxu0 %v514
      %550 = vmatpush.msra.mxu0 %v513
      %551 = vmatpush.msra.mxu0 %v512
      %552 = vmatpush.msra.mxu0 %v511
      %553 = vmatpush.msra.mxu0 %v510
      %554 = vmatpush.msra.mxu0 %v509
      %555 = vmatpush.msra.mxu0 %v508
      %556 = vmatpush.msra.mxu0 %v507
      %557 = vmatpush.msra.mxu0 %v506
      %558 = vmatmul.f32.gmra.mxu0 %v498
      %v559 = vpop.f32.mrf.mxu0
      %v560 = vadd.f32 %v540, %v559
      %561 = vmatmul.f32.gmra.mxu0 %v500
      %v562 = vpop.f32.mrf.mxu0
      %v563 = vadd.f32 %v540, %v562
      %564 = vmatmul.f32.gmra.mxu0 %v502
      %v565 = vpop.f32.mrf.mxu0
      %v566 = vadd.f32 %v540, %v565
      %567 = vmatmul.f32.gmra.mxu0 %v504
      %v568 = vpop.f32.mrf.mxu0
      %v569 = vadd.f32 %v540, %v568
      %570 = vdwg.mxu0
      %571 = vmatpush.msra.mxu0 %v537
      %572 = vmatpush.msra.mxu0 %v536
      %573 = vmatpush.msra.mxu0 %v535
      %574 = vmatpush.msra.mxu0 %v534
      %575 = vmatpush.msra.mxu0 %v533
      %576 = vmatpush.msra.mxu0 %v532
      %577 = vmatpush.msra.mxu0 %v531
      %578 = vmatpush.msra.mxu0 %v530
      %579 = vmatpush.msra.mxu0 %v529
      %580 = vmatpush.msra.mxu0 %v528
      %581 = vmatpush.msra.mxu0 %v527
      %582 = vmatpush.msra.mxu0 %v526
      %583 = vmatpush.msra.mxu0 %v525
      %584 = vmatpush.msra.mxu0 %v524
      %585 = vmatpush.msra.mxu0 %v523
      %586 = vmatpush.msra.mxu0 %v522
      %587 = vmatmul.f32.gmra.mxu0 %v499
      %v588 = vpop.f32.mrf.mxu0
      %v589 = vadd.f32 %v560, %v588
      %590 = vmatmul.f32.gmra.mxu0 %v501
      %v591 = vpop.f32.mrf.mxu0
      %v592 = vadd.f32 %v563, %v591
      %593 = vmatmul.f32.gmra.mxu0 %v503
      %v594 = vpop.f32.mrf.mxu0
      %v595 = vadd.f32 %v566, %v594
      %596 = vmatmul.f32.gmra.mxu0 %v505
      %v597 = vpop.f32.mrf.mxu0
      %v598 = vadd.f32 %v569, %v597
      %599 = vdwg.mxu0
      %vm600 = vcmask 261120
      %601 = vst.msk [vmem:[%s229] sm:$0xff] %vm600, %v589
      %602 = vst.msk [vmem:[%s229 + $0x8] sm:$0xff] %vm600, %v592
      %603 = vst.msk [vmem:[%s229 + $0x10] sm:$0xff] %vm600, %v595
      %604 = vst.msk [vmem:[%s229 + $0x18] sm:$0xff] %vm600, %v598
      %s605 = smul.u32 4, %s16
      %p606 = scmp.lt.s32.totalorder %s605, 7
      %s607 = scalar_select %p606, %s605, 7
      %s608 = smul.addr %s607, 8
      %s609 = scalar_lea.vmem %s5, %s608
      // Predicated region
      $region41: #{tpu_custom_call.1} parent=39 // pred_check
        %p610 = pneg %p144
      $region42: #{tpu_custom_call.1} parent=39 // pred_check_branch
        %612 = sbr.rel (%p610) target = $region44
      $region43: #{tpu_custom_call.1} parent=39 // pred_region
        %s613 = smul.u32 4, %s16
      $region44: #{tpu_custom_call.1} parent=39 // pred_fallthru
        _
    $region40: #{tpu_custom_call.1} parent=5 // pred_fallthru
      _
    %p614 = scmp.le.s32.totalorder 2, %s11
    // Predicated region
    $region45: #{tpu_custom_call.1} parent=5 // pred_check
      %p615 = pneg %p614
    $region46: #{tpu_custom_call.1} parent=5 // pred_check_branch
      %617 = sbr.rel (%p615) target = $region48
    $region47: #{tpu_custom_call.1} parent=5 // pred_region
      %s618 = ssub.s32 %s11, 2
      // Predicated region
      $region49: #{tpu_custom_call.1} parent=47 // pred_check
        %p619 = pneg %p150
      $region50: #{tpu_custom_call.1} parent=47 // pred_check_branch
        %621 = sbr.rel (%p619) target = $region52
      $region51: #{tpu_custom_call.1} parent=47 // pred_region
        %s622 = smul.u32 4, %s17
        %p623 = scmp.lt.s32.totalorder %s622, 7
        %s624 = scalar_select %p623, %s622, 7
        %s625 = smul.addr %s624, 8
        %s626 = scalar_lea.vmem %s5, %s625
      $region52: #{tpu_custom_call.1} parent=47 // pred_fallthru
        _
    $region48: #{tpu_custom_call.1} parent=5 // pred_fallthru
      _
  $region6: #{tpu_custom_call.1} parent=0 // loop_footer
    %s15 = sadd.s32 1, %s11
  $region7: #{tpu_custom_call.1} parent=0 // loop_footer_branch
    %10 = sbr.rel target = $region3
  $region8: #{tpu_custom_call.1} parent=0 // loop_exit
    _

</llo_original>
